<compile_context>
chip_gen: v6e
topology: v6e:2x2x1
jax: 0.10.0
libtpu: 0.0.40
codegen_flags: <defaults>
</compile_context>

<pallas_src>
import functools

import jax
import jax.numpy as jnp
from jax.experimental import pallas as pl
from jax.experimental.pallas import tpu as pltpu


def _round_up(x, m):
    return (x + m - 1) // m * m


# ------------------------------- the kernel -------------------------------

def _mlp_kernel(*refs, has_bias: bool):
    if has_bias:
        (x_ref, gw_ref, uw_ref, dw_ref, gb_ref, ub_ref, db_ref,
         out_ref, acc_ref) = refs
    else:
        x_ref, gw_ref, uw_ref, dw_ref, out_ref, acc_ref = refs

    k = pl.program_id(1)

    @pl.when(k == 0)
    def _init():
        acc_ref[...] = jnp.zeros_like(acc_ref)

    x = x_ref[...]                                                      # [TS, D]

    # gate / up projections for this intermediate block, f32 MXU accumulation.
    g = jnp.dot(x, gw_ref[...], preferred_element_type=jnp.float32)    # [TS, TI] f32
    u = jnp.dot(x, uw_ref[...], preferred_element_type=jnp.float32)    # [TS, TI] f32
    if has_bias:
        g = g + gb_ref[...].astype(jnp.float32)
        u = u + ub_ref[...].astype(jnp.float32)

    # SiLU gate in f32 (sigmoid goes to the EUP slot).
    h = (g * jax.nn.sigmoid(g)) * u                                     # [TS, TI] f32
    h = h.astype(dw_ref.dtype)                                          # matmul dtype

    # Partial down projection, accumulated across intermediate blocks.
    acc_ref[...] += jnp.dot(h, dw_ref[...], preferred_element_type=jnp.float32)

    @pl.when(k == pl.num_programs(1) - 1)
    def _finalize():
        y = acc_ref[...]
        if has_bias:
            y = y + db_ref[...].astype(jnp.float32)
        out_ref[...] = y.astype(out_ref.dtype)


# ------------------------------- wrapper -----------------------------------

def qwen25_vl_mlp(hidden_state, gate_w, up_w, down_w,
                  gate_b=None, up_b=None, down_b=None,
                  *, tile_s=256, tile_i=512, interpret=False):
    """hidden_state: [S, D]; gate_w/up_w: [D, I]; down_w: [I, D]; biases optional."""
    S, D = hidden_state.shape
    Dg, I = gate_w.shape
    assert Dg == D and up_w.shape == (D, I) and down_w.shape == (I, D)

    provided = [b is not None for b in (gate_b, up_b, down_b)]
    if any(provided) and not all(provided):
        raise ValueError("gate_b / up_b / down_b must be provided together or all be None")
    has_bias = all(provided)

    # ---- sequence tiling: partial last block is masked on the output write ----
    row_mult = 16 if hidden_state.dtype == jnp.bfloat16 else 8
    ts = max(row_mult, min(_round_up(tile_s, row_mult), _round_up(S, row_mult)))
    grid_s = pl.cdiv(S, ts)

    # ---- intermediate-dim tiling (reduction axis with f32 accumulator) ----
    if I <= tile_i:
        ti, I_pad = I, I
    else:
        ti = _round_up(tile_i, 256)          # MXU-tile aligned (v6e/v7x 256, v5e x128)
        I_pad = _round_up(I, ti)
    grid_i = I_pad // ti

    gb = ub = db = None
    if has_bias:
        gb = gate_b.reshape(1, I)
        ub = up_b.reshape(1, I)
        db = down_b.reshape(1, D)

    if I_pad != I:
        # TODO(synk): zero-pad the weights once at weight-load time, not per call.
        pad = I_pad - I
        gate_w = jnp.pad(gate_w, ((0, 0), (0, pad)))
        up_w = jnp.pad(up_w, ((0, 0), (0, pad)))
        down_w = jnp.pad(down_w, ((0, pad), (0, 0)))
        if has_bias:
            gb = jnp.pad(gb, ((0, 0), (0, pad)))
            ub = jnp.pad(ub, ((0, 0), (0, pad)))

    inputs = [hidden_state, gate_w, up_w, down_w]
    in_specs = [
        pl.BlockSpec((ts, D), lambda i, k: (i, 0)),    # activation tile (revisited over k)
        pl.BlockSpec((D, ti), lambda i, k: (0, k)),    # gate_w block (streamed)
        pl.BlockSpec((D, ti), lambda i, k: (0, k)),    # up_w block (streamed)
        pl.BlockSpec((ti, D), lambda i, k: (k, 0)),    # down_w block (streamed)
    ]
    if has_bias:
        inputs += [gb, ub, db]
        in_specs += [
            pl.BlockSpec((1, ti), lambda i, k: (0, k)),
            pl.BlockSpec((1, ti), lambda i, k: (0, k)),
            pl.BlockSpec((1, D), lambda i, k: (0, 0)),
        ]

    # ---- VMEM budget from the actual tile footprint, capped at hardware VMEM ----
    ab = jnp.dtype(hidden_state.dtype).itemsize
    wb = jnp.dtype(gate_w.dtype).itemsize
    est = (2 * 3 * D * ti * wb            # streamed weight blocks, double-buffered
           + 2 * 2 * ts * D * ab          # activation in/out tiles, double-buffered
           + ts * D * 4                   # f32 accumulator
           + 3 * ts * ti * 4              # g / u / h f32 intermediates
           + 4 * (2 * ti + D) * 4)        # biases (generous)
    try:
        vmem_cap = int(pltpu.get_tpu_info().vmem_capacity_bytes)
    except Exception:
        vmem_cap = 64 << 20               # v7x per-TC VMEM: safe lower bound
    vmem_limit = int(min(vmem_cap - (2 << 20), max(int(1.3 * est), 32 << 20)))

    cost = pl.CostEstimate(
        flops=2 * S * D * 3 * I,
        transcendentals=S * I,
        bytes_accessed=int((gate_w.size + up_w.size + down_w.size) * wb
                           + 2 * S * D * ab))

    out = pl.pallas_call(
        functools.partial(_mlp_kernel, has_bias=has_bias),
        out_shape=jax.ShapeDtypeStruct((S, D), hidden_state.dtype),
        grid=(grid_s, grid_i),
        in_specs=in_specs,
        out_specs=pl.BlockSpec((ts, D), lambda i, k: (i, 0)),
        scratch_shapes=[pltpu.VMEM((ts, D), jnp.float32)],
        compiler_params=pltpu.CompilerParams(
            dimension_semantics=("parallel", "arbitrary"),
            vmem_limit_bytes=vmem_limit),
        cost_estimate=cost,
        interpret=interpret,
    )(*inputs)
    return out


# ---------------------- pure-JAX reference (sanity) -------------------------

def _reference(x, gate_w, up_w, down_w, gate_b=None, up_b=None, down_b=None):
    x = x.astype(jnp.float32)
    g = x @ gate_w.astype(jnp.float32)
    u = x @ up_w.astype(jnp.float32)
    if gate_b is not None:
        g = g + gate_b.astype(jnp.float32)
        u = u + up_b.astype(jnp.float32)
    y = (jax.nn.silu(g) * u) @ down_w.astype(jnp.float32)
    if down_b is not None:
        y = y + down_b.astype(jnp.float32)
    return y


# --------------------------------- main -------------------------------------

if __name__ == "__main__":
    key = jax.random.PRNGKey(0)
    ks = jax.random.split(key, 16)

    # ---- test 1: tiny f32, bias=False (module default), single tile ----
    S, D, I = 8, 32, 64
    x = jax.random.normal(ks[0], (S, D), jnp.float32)
    gate_w = (0.05 * jax.random.normal(ks[1], (D, I))).astype(jnp.float32)
    up_w = (0.05 * jax.random.normal(ks[2], (D, I))).astype(jnp.float32)
    down_w = (0.05 * jax.random.normal(ks[3], (I, D))).astype(jnp.float32)

    out = jax.block_until_ready(qwen25_vl_mlp(x, gate_w, up_w, down_w))
    ref = _reference(x, gate_w, up_w, down_w)
    assert out.shape == (S, D)
    assert jnp.allclose(out, ref, atol=1e-5, rtol=1e-5), "f32 mismatch vs JAX reference"

    # ---- test 2: f32 with bias, multi-tile in both grid axes ----
    S2, D2, I2 = 48, 128, 384
    x2 = jax.random.normal(ks[4], (S2, D2), jnp.float32)
    gw2 = (0.05 * jax.random.normal(ks[5], (D2, I2))).astype(jnp.float32)
    uw2 = (0.05 * jax.random.normal(ks[6], (D2, I2))).astype(jnp.float32)
    dw2 = (0.05 * jax.random.normal(ks[7], (I2, D2))).astype(jnp.float32)
    gb2 = (0.05 * jax.random.normal(ks[8], (I2,))).astype(jnp.float32)
    ub2 = (0.05 * jax.random.normal(ks[9], (I2,))).astype(jnp.float32)
    db2 = (0.05 * jax.random.normal(ks[10], (D2,))).astype(jnp.float32)

    out2 = jax.block_until_ready(
        qwen25_vl_mlp(x2, gw2, uw2, dw2, gb2, ub2, db2, tile_s=16, tile_i=384))
    ref2 = _reference(x2, gw2, uw2, dw2, gb2, ub2, db2)
    assert out2.shape == (S2, D2)
    assert jnp.allclose(out2, ref2, atol=1e-4, rtol=1e-4), "f32+bias mismatch vs reference"

    # ---- test 3: bf16, bias, partial last seq block, I not MXU-aligned (padded) ----
    S3, D3, I3 = 300, 128, 320
    x3 = jax.random.normal(ks[11], (S3, D3)).astype(jnp.bfloat16)
    gw3 = (0.05 * jax.random.normal(ks[12], (D3, I3))).astype(jnp.bfloat16)
    uw3 = (0.05 * jax.random.normal(ks[13], (D3, I3))).astype(jnp.bfloat16)
    dw3 = (0.05 * jax.random.normal(ks[14], (I3, D3))).astype(jnp.bfloat16)
    gb3 = (0.05 * jax.random.normal(ks[15], (I3,))).astype(jnp.bfloat16)
    ub3 = jnp.zeros((I3,), jnp.bfloat16)
    db3 = jnp.zeros((D3,), jnp.bfloat16)

    out3 = jax.block_until_ready(
        qwen25_vl_mlp(x3, gw3, uw3, dw3, gb3, ub3, db3, tile_s=128, tile_i=128))
    ref3 = _reference(x3, gw3, uw3, dw3, gb3, ub3, db3)
    assert out3.shape == (S3, D3)
    assert jnp.allclose(out3.astype(jnp.float32), ref3, atol=5e-2, rtol=5e-2), \
        "bf16 mismatch vs JAX reference"

    print("KERNEL_OK")
</pallas_src>

<mosaic_0001>
module attributes {stable_mosaic.version = 11 : i64} {
  func.func @_mlp_kernel(%arg0: i32, %arg1: i32, %arg2: memref<8x32xf32, #tpu.memory_space<vmem>>, %arg3: memref<32x64xf32, #tpu.memory_space<vmem>>, %arg4: memref<32x64xf32, #tpu.memory_space<vmem>>, %arg5: memref<64x32xf32, #tpu.memory_space<vmem>>, %arg6: memref<8x32xf32, #tpu.memory_space<vmem>>, %arg7: memref<8x32xf32, #tpu.memory_space<vmem>>) attributes {dimension_semantics = [#tpu.dimension_semantics<parallel>, #tpu.dimension_semantics<arbitrary>], iteration_bounds = array<i64: 1, 1>, scalar_prefetch = 0 : i64, scratch_operands = 1 : i64, tpu.core_type = #tpu.core_type<tc>, window_params = [{transform_indices = @transform_0, window_bounds = array<i64: 8, 32>}, {transform_indices = @transform_1, window_bounds = array<i64: 32, 64>}, {transform_indices = @transform_2, window_bounds = array<i64: 32, 64>}, {transform_indices = @transform_3, window_bounds = array<i64: 64, 32>}, {transform_indices = @transform_4, window_bounds = array<i64: 8, 32>}]} {
    %c0_i32 = arith.constant 0 : i32
    %0 = arith.cmpi eq, %arg1, %c0_i32 : i32
    %1 = arith.extui %0 : i1 to i32
    %c0_i32_0 = arith.constant 0 : i32
    %2 = arith.cmpi ne, %1, %c0_i32_0 : i32
    scf.if %2 {
      %cst_17 = arith.constant 0.000000e+00 : f32
      %23 = vector.broadcast %cst_17 : f32 to vector<8x32xf32>
      %c0_18 = arith.constant 0 : index
      %c0_19 = arith.constant 0 : index
      %24 = vector.load %arg7[%c0_18, %c0_19] : memref<8x32xf32, #tpu.memory_space<vmem>>, vector<8x32xf32>
      tpu.vector_store %arg7[%c0_18, %c0_19], %23 {strides = array<i32>} : memref<8x32xf32, #tpu.memory_space<vmem>>, vector<8x32xf32>,
    } else {
    }
    %c0 = arith.constant 0 : index
    %c0_1 = arith.constant 0 : index
    %3 = vector.load %arg2[%c0, %c0_1] : memref<8x32xf32, #tpu.memory_space<vmem>>, vector<8x32xf32>
    %c0_2 = arith.constant 0 : index
    %c0_3 = arith.constant 0 : index
    %4 = vector.load %arg3[%c0_2, %c0_3] : memref<32x64xf32, #tpu.memory_space<vmem>>, vector<32x64xf32>
    %cst = arith.constant dense<0.000000e+00> : vector<8x64xf32>
    %5 = tpu.matmul %3, %4, %cst {dimension_numbers = #tpu.dot_dimension_numbers<[1], [0], [0], [1], [0, 0, 1, 1], [], []>} : vector<8x32xf32>, vector<32x64xf32>, vector<8x64xf32> -> vector<8x64xf32>
    %c0_4 = arith.constant 0 : index
    %c0_5 = arith.constant 0 : index
    %6 = vector.load %arg4[%c0_4, %c0_5] : memref<32x64xf32, #tpu.memory_space<vmem>>, vector<32x64xf32>
    %cst_6 = arith.constant dense<0.000000e+00> : vector<8x64xf32>
    %7 = tpu.matmul %3, %6, %cst_6 {dimension_numbers = #tpu.dot_dimension_numbers<[1], [0], [0], [1], [0, 0, 1, 1], [], []>} : vector<8x32xf32>, vector<32x64xf32>, vector<8x64xf32> -> vector<8x64xf32>
    %8 = arith.negf %5 : vector<8x64xf32>
    %9 = math.exp %8 : vector<8x64xf32>
    %cst_7 = arith.constant 1.000000e+00 : f32
    %10 = vector.broadcast %cst_7 : f32 to vector<8x64xf32>
    %11 = arith.addf %10, %9 : vector<8x64xf32>
    %12 = arith.divf %10, %11 : vector<8x64xf32>
    %13 = arith.mulf %5, %12 : vector<8x64xf32>
    %14 = arith.mulf %13, %7 : vector<8x64xf32>
    %c0_8 = arith.constant 0 : index
    %c0_9 = arith.constant 0 : index
    %15 = vector.load %arg7[%c0_8, %c0_9] : memref<8x32xf32, #tpu.memory_space<vmem>>, vector<8x32xf32>
    %c0_10 = arith.constant 0 : index
    %c0_11 = arith.constant 0 : index
    %16 = vector.load %arg5[%c0_10, %c0_11] : memref<64x32xf32, #tpu.memory_space<vmem>>, vector<64x32xf32>
    %cst_12 = arith.constant dense<0.000000e+00> : vector<8x32xf32>
    %17 = tpu.matmul %14, %16, %cst_12 {dimension_numbers = #tpu.dot_dimension_numbers<[1], [0], [0], [1], [0, 0, 1, 1], [], []>} : vector<8x64xf32>, vector<64x32xf32>, vector<8x32xf32> -> vector<8x32xf32>
    %18 = arith.addf %15, %17 : vector<8x32xf32>
    %c0_13 = arith.constant 0 : index
    %c0_14 = arith.constant 0 : index
    %19 = vector.load %arg7[%c0_13, %c0_14] : memref<8x32xf32, #tpu.memory_space<vmem>>, vector<8x32xf32>
    tpu.vector_store %arg7[%c0_13, %c0_14], %18 {strides = array<i32>} : memref<8x32xf32, #tpu.memory_space<vmem>>, vector<8x32xf32>,
    %c0_i32_15 = arith.constant 0 : i32
    %20 = arith.cmpi eq, %arg1, %c0_i32_15 : i32
    %21 = arith.extui %20 : i1 to i32
    %c0_i32_16 = arith.constant 0 : i32
    %22 = arith.cmpi ne, %21, %c0_i32_16 : i32
    scf.if %22 {
      %c0_17 = arith.constant 0 : index
      %c0_18 = arith.constant 0 : index
      %23 = vector.load %arg7[%c0_17, %c0_18] : memref<8x32xf32, #tpu.memory_space<vmem>>, vector<8x32xf32>
      %c0_19 = arith.constant 0 : index
      %c0_20 = arith.constant 0 : index
      %24 = vector.load %arg6[%c0_19, %c0_20] : memref<8x32xf32, #tpu.memory_space<vmem>>, vector<8x32xf32>
      tpu.vector_store %arg6[%c0_19, %c0_20], %23 {strides = array<i32>} : memref<8x32xf32, #tpu.memory_space<vmem>>, vector<8x32xf32>,
    } else {
    }
    return
  }
  func.func @transform_0(%arg0: i32, %arg1: i32) -> (i32, i32) {
    %c0_i32 = arith.constant 0 : i32
    %c0_i32_0 = arith.constant 0 : i32
    return %arg0, %c0_i32 : i32, i32
  }
  func.func @transform_1(%arg0: i32, %arg1: i32) -> (i32, i32) {
    %c0_i32 = arith.constant 0 : i32
    %c0_i32_0 = arith.constant 0 : i32
    return %c0_i32, %arg1 : i32, i32
  }
  func.func @transform_2(%arg0: i32, %arg1: i32) -> (i32, i32) {
    %c0_i32 = arith.constant 0 : i32
    %c0_i32_0 = arith.constant 0 : i32
    return %c0_i32, %arg1 : i32, i32
  }
  func.func @transform_3(%arg0: i32, %arg1: i32) -> (i32, i32) {
    %c0_i32 = arith.constant 0 : i32
    %c0_i32_0 = arith.constant 0 : i32
    return %arg1, %c0_i32 : i32, i32
  }
  func.func @transform_4(%arg0: i32, %arg1: i32) -> (i32, i32) {
    %c0_i32 = arith.constant 0 : i32
    %c0_i32_0 = arith.constant 0 : i32
    return %arg0, %c0_i32 : i32, i32
  }
}

</mosaic_0001>

<llo_original>
// kernel: tpu_custom_call.1
$region0: #{tpu_custom_call.1}
  #allocation0 [shape = 'u32[]', space=smem, size = 0x4, offset = 0x4, fixed_abs, tag = 'smem constant byte address 0x4 - core index']
  #allocation1 [shape = 'u32[144,128]{1,0:T(1,128)}', space=vmem, size = 0x12000, scoped, tag = 'internal scratch']
  #allocation2 [shape = 'f32[8,32]{1,0:T(8,128)}', space=vmem, size = 0x1000, scoped, tag = 'scratch operand']
  %s0 = inlined_call_operand.vmem [shape: f32[8,32], index: 0, kind: input, shape index: {}]
  %s1 = inlined_call_operand.vmem [shape: f32[32,64], index: 1, kind: input, shape index: {}]
  %s2 = inlined_call_operand.vmem [shape: f32[32,64], index: 2, kind: input, shape index: {}]
  %s3 = inlined_call_operand.vmem [shape: f32[64,32], index: 3, kind: input, shape index: {}]
  %s4 = inlined_call_operand.hbm [shape: f32[8,32], index: 4, kind: output, shape index: {}]
  %s5 = sld [smem:[#allocation0]]
  $region34: #{tpu_custom_call.1} parent=0
    _
  %s7 = ssub.s32 1, %s5
  %s8 = scalar_select 0, %s7, %s5
  $region1: #{tpu_custom_call.1} parent=0
    #allocation3 [shape = 'u8[4096]{0}', space=vmem, size = 0x1000, scoped, tag = 'output window, operand 0, single buffered']
    #allocation4 [shape = 's32[1]{0}', space=sflag, size = 0x4, scoped, tag = 'scoped memory for tpu_custom_call.1']
    %9 = vsyncpa [#allocation4], 0
    // Predicated region
    $region2: #{tpu_custom_call.1} parent=1 // pred_check
      _
    $region3: #{tpu_custom_call.1} parent=1 // pred_check_branch
      %11 = sbr.rel (0) target = $region5
    $region4: #{tpu_custom_call.1} parent=1 // pred_region
      _
    $region5: #{tpu_custom_call.1} parent=1 // pred_fallthru
      _
    // Predicated region
    $region6: #{tpu_custom_call.1} parent=1 // pred_check
      _
    $region7: #{tpu_custom_call.1} parent=1 // pred_check_branch
      %13 = sbr.rel (0) target = $region9
    $region8: #{tpu_custom_call.1} parent=1 // pred_region
      _
    $region9: #{tpu_custom_call.1} parent=1 // pred_fallthru
      _
    // Predicated region
    $region10: #{tpu_custom_call.1} parent=1 // pred_check
      _
    $region11: #{tpu_custom_call.1} parent=1 // pred_check_branch
      %15 = sbr.rel (0) target = $region13
    $region12: #{tpu_custom_call.1} parent=1 // pred_region
      _
    $region13: #{tpu_custom_call.1} parent=1 // pred_fallthru
      _
    // Predicated region
    $region14: #{tpu_custom_call.1} parent=1 // pred_check
      _
    $region15: #{tpu_custom_call.1} parent=1 // pred_check_branch
      %17 = sbr.rel (0) target = $region17
    $region16: #{tpu_custom_call.1} parent=1 // pred_region
      _
    $region17: #{tpu_custom_call.1} parent=1 // pred_fallthru
      _
    %p18 = scmp.eq.s32.totalorder 0, 0
    // Predicated region
    $region18: #{tpu_custom_call.1} parent=1 // pred_check
      %p19 = pneg %p18
    $region19: #{tpu_custom_call.1} parent=1 // pred_check_branch
      %21 = sbr.rel (%p19) target = $region21
    $region20: #{tpu_custom_call.1} parent=1 // pred_region
      %vm22 = vcmask 261120
      %23 = vst.msk [vmem:[#allocation2] sm:$0xff] %vm22, 0.0
    $region21: #{tpu_custom_call.1} parent=1 // pred_fallthru
      _
    %v24 = vld [vmem:[%s0] sm:$0xff]
    %v25 = vld [vmem:[%s1] sm:$0xff]
    %v26 = vld [vmem:[%s1 + $0x8] sm:$0xff]
    %v27 = vld [vmem:[%s1 + $0x10] sm:$0xff]
    %v28 = vld [vmem:[%s1 + $0x18] sm:$0xff]
    %vm29 = vcmask 261120
    %v31 = vsel %vm29, %v24, 0
    %33 = vmatprep.subr.mxu0 0.0
    %34 = vmatpush1.msra.mxu0 0.0
    %35 = vmatprep.subr.mxu0 0.0
    %36 = vmatpush1.msra.mxu0 0.0
    %37 = vmatprep.subr.mxu0 0.0
    %38 = vmatpush1.msra.mxu0 0.0
    %39 = vmatprep.subr.mxu0 0.0
    %40 = vmatpush1.msra.mxu0 0.0
    %41 = vmatprep.subr.mxu0 0.0
    %42 = vmatpush1.msra.mxu0 0.0
    %43 = vmatprep.subr.mxu0 0.0
    %44 = vmatpush1.msra.mxu0 0.0
    %45 = vmatprep.subr.mxu0 0.0
    %46 = vmatpush1.msra.mxu0 0.0
    %47 = vmatprep.subr.mxu0 0.0
    %48 = vmatpush1.msra.mxu0 0.0
    %49 = vmatprep.subr.mxu0 0.0
    %50 = vmatpush1.msra.mxu0 0.0
    %51 = vmatprep.subr.mxu0 0.0
    %52 = vmatpush1.msra.mxu0 0.0
    %53 = vmatprep.subr.mxu0 0.0
    %54 = vmatpush1.msra.mxu0 0.0
    %55 = vmatprep.subr.mxu0 0.0
    %56 = vmatpush1.msra.mxu0 0.0
    %57 = vmatprep.subr.mxu0 0.0
    %58 = vmatpush1.msra.mxu0 %v28
    %59 = vmatprep.subr.mxu0 0.0
    %60 = vmatpush1.msra.mxu0 %v27
    %61 = vmatprep.subr.mxu0 0.0
    %62 = vmatpush1.msra.mxu0 %v26
    %63 = vmatprep.subr.mxu0 0.0
    %64 = vmatpush1.msra.mxu0 %v25
    %65 = vmatprep.subr.mxu0 0.0
    %66 = vmatpush2.msra.mxu0 0.0
    %67 = vmatprep.subr.mxu0 0.0
    %68 = vmatpush2.msra.mxu0 0.0
    %69 = vmatprep.subr.mxu0 0.0
    %70 = vmatpush2.msra.mxu0 0.0
    %71 = vmatprep.subr.mxu0 0.0
    %72 = vmatpush2.msra.mxu0 0.0
    %73 = vmatprep.subr.mxu0 0.0
    %74 = vmatpush2.msra.mxu0 0.0
    %75 = vmatprep.subr.mxu0 0.0
    %76 = vmatpush2.msra.mxu0 0.0
    %77 = vmatprep.subr.mxu0 0.0
    %78 = vmatpush2.msra.mxu0 0.0
    %79 = vmatprep.subr.mxu0 0.0
    %80 = vmatpush2.msra.mxu0 0.0
    %81 = vmatprep.subr.mxu0 0.0
    %82 = vmatpush2.msra.mxu0 0.0
    %83 = vmatprep.subr.mxu0 0.0
    %84 = vmatpush2.msra.mxu0 0.0
    %85 = vmatprep.subr.mxu0 0.0
    %86 = vmatpush2.msra.mxu0 0.0
    %87 = vmatprep.subr.mxu0 0.0
    %88 = vmatpush2.msra.mxu0 0.0
    %89 = vmatprep.subr.mxu0 0.0
    %90 = vmatpush2.msra.mxu0 0.0
    %91 = vmatprep.subr.mxu0 0.0
    %92 = vmatpush2.msra.mxu0 0.0
    %93 = vmatprep.subr.mxu0 0.0
    %94 = vmatpush2.msra.mxu0 0.0
    %95 = vmatprep.subr.mxu0 0.0
    %96 = vmatpush2.msra.mxu0 0.0
    %97 = vmatprep.mubr.f32.mxu0 0.0
    %98 = vmatmul.mubr.f32.gmra.mxu0 %v31
    %v99 = vpop.f32.mrf.mxu0
    %v100 = vadd.f32 0.0, %v99
    %v101 = vpop.f32.mrf.mxu0
    %102 = vdwg.mxu0
    %v103 = vld [vmem:[%s2] sm:$0xff]
    %v104 = vld [vmem:[%s2 + $0x8] sm:$0xff]
    %v105 = vld [vmem:[%s2 + $0x10] sm:$0xff]
    %v106 = vld [vmem:[%s2 + $0x18] sm:$0xff]
    %107 = vmatprep.subr.mxu0 0.0
    %108 = vmatpush1.msra.mxu0 0.0
    %109 = vmatprep.subr.mxu0 0.0
    %110 = vmatpush1.msra.mxu0 0.0
    %111 = vmatprep.subr.mxu0 0.0
    %112 = vmatpush1.msra.mxu0 0.0
    %113 = vmatprep.subr.mxu0 0.0
    %114 = vmatpush1.msra.mxu0 0.0
    %115 = vmatprep.subr.mxu0 0.0
    %116 = vmatpush1.msra.mxu0 0.0
    %117 = vmatprep.subr.mxu0 0.0
    %118 = vmatpush1.msra.mxu0 0.0
    %119 = vmatprep.subr.mxu0 0.0
    %120 = vmatpush1.msra.mxu0 0.0
    %121 = vmatprep.subr.mxu0 0.0
    %122 = vmatpush1.msra.mxu0 0.0
    %123 = vmatprep.subr.mxu0 0.0
    %124 = vmatpush1.msra.mxu0 0.0
    %125 = vmatprep.subr.mxu0 0.0
    %126 = vmatpush1.msra.mxu0 0.0
    %127 = vmatprep.subr.mxu0 0.0
    %128 = vmatpush1.msra.mxu0 0.0
    %129 = vmatprep.subr.mxu0 0.0
    %130 = vmatpush1.msra.mxu0 0.0
    %131 = vmatprep.subr.mxu0 0.0
    %132 = vmatpush1.msra.mxu0 %v106
    %133 = vmatprep.subr.mxu0 0.0
    %134 = vmatpush1.msra.mxu0 %v105
    %135 = vmatprep.subr.mxu0 0.0
    %136 = vmatpush1.msra.mxu0 %v104
    %137 = vmatprep.subr.mxu0 0.0
    %138 = vmatpush1.msra.mxu0 %v103
    %139 = vmatprep.subr.mxu0 0.0
    %140 = vmatpush2.msra.mxu0 0.0
    %141 = vmatprep.subr.mxu0 0.0
    %142 = vmatpush2.msra.mxu0 0.0
    %143 = vmatprep.subr.mxu0 0.0
    %144 = vmatpush2.msra.mxu0 0.0
    %145 = vmatprep.subr.mxu0 0.0
    %146 = vmatpush2.msra.mxu0 0.0
    %147 = vmatprep.subr.mxu0 0.0
    %148 = vmatpush2.msra.mxu0 0.0
    %149 = vmatprep.subr.mxu0 0.0
    %150 = vmatpush2.msra.mxu0 0.0
    %151 = vmatprep.subr.mxu0 0.0
    %152 = vmatpush2.msra.mxu0 0.0
    %153 = vmatprep.subr.mxu0 0.0
    %154 = vmatpush2.msra.mxu0 0.0
    %155 = vmatprep.subr.mxu0 0.0
    %156 = vmatpush2.msra.mxu0 0.0
    %157 = vmatprep.subr.mxu0 0.0
    %158 = vmatpush2.msra.mxu0 0.0
    %159 = vmatprep.subr.mxu0 0.0
    %160 = vmatpush2.msra.mxu0 0.0
    %161 = vmatprep.subr.mxu0 0.0
    %162 = vmatpush2.msra.mxu0 0.0
    %163 = vmatprep.subr.mxu0 0.0
    %164 = vmatpush2.msra.mxu0 0.0
    %165 = vmatprep.subr.mxu0 0.0
    %166 = vmatpush2.msra.mxu0 0.0
    %167 = vmatprep.subr.mxu0 0.0
    %168 = vmatpush2.msra.mxu0 0.0
    %169 = vmatprep.subr.mxu0 0.0
    %170 = vmatpush2.msra.mxu0 0.0
    %171 = vmatprep.mubr.f32.mxu0 0.0
    %172 = vmatmul.mubr.f32.gmra.mxu0 %v31
    %v173 = vpop.f32.mrf.mxu0
    %v174 = vadd.f32 0.0, %v173
    %v175 = vpop.f32.mrf.mxu0
    %176 = vdwg.mxu0
    %v177 = vxor.u32 %v100, 2147483648
    %v178 = vmul.f32 %v177, 1.442695
    %v179 = vpow.pop %v178
    %v180 = vadd.f32 %v179, 1.0
    %v181 = vrcp.pop %v180
    %v182 = vmul.f32 1.0, %v181
    %v183 = vmul.f32 %v100, %v182
    %v184 = vmul.f32 %v183, %v174
    %v185 = vld [vmem:[#allocation2] sm:$0xff]
    %v186 = vld [vmem:[%s3] sm:$0xff]
    %v187 = vld [vmem:[%s3 + $0x8] sm:$0xff]
    %v188 = vld [vmem:[%s3 + $0x10] sm:$0xff]
    %v189 = vld [vmem:[%s3 + $0x18] sm:$0xff]
    %v190 = vld [vmem:[%s3 + $0x20] sm:$0xff]
    %v191 = vld [vmem:[%s3 + $0x28] sm:$0xff]
    %v192 = vld [vmem:[%s3 + $0x30] sm:$0xff]
    %v193 = vld [vmem:[%s3 + $0x38] sm:$0xff]
    %vm194 = vcmask 523264
    %v196 = vsel %vm194, %v184, 0
    %198 = vmatprep.subr.mxu0 0.0
    %199 = vmatpush1.msra.mxu0 0.0
    %200 = vmatprep.subr.mxu0 0.0
    %201 = vmatpush1.msra.mxu0 0.0
    %202 = vmatprep.subr.mxu0 0.0
    %203 = vmatpush1.msra.mxu0 0.0
    %204 = vmatprep.subr.mxu0 0.0
    %205 = vmatpush1.msra.mxu0 0.0
    %206 = vmatprep.subr.mxu0 0.0
    %207 = vmatpush1.msra.mxu0 0.0
    %208 = vmatprep.subr.mxu0 0.0
    %209 = vmatpush1.msra.mxu0 0.0
    %210 = vmatprep.subr.mxu0 0.0
    %211 = vmatpush1.msra.mxu0 0.0
    %212 = vmatprep.subr.mxu0 0.0
    %213 = vmatpush1.msra.mxu0 0.0
    %214 = vmatprep.subr.mxu0 0.0
    %215 = vmatpush1.msra.mxu0 %v193
    %216 = vmatprep.subr.mxu0 0.0
    %217 = vmatpush1.msra.mxu0 %v192
    %218 = vmatprep.subr.mxu0 0.0
    %219 = vmatpush1.msra.mxu0 %v191
    %220 = vmatprep.subr.mxu0 0.0
    %221 = vmatpush1.msra.mxu0 %v190
    %222 = vmatprep.subr.mxu0 0.0
    %223 = vmatpush1.msra.mxu0 %v189
    %224 = vmatprep.subr.mxu0 0.0
    %225 = vmatpush1.msra.mxu0 %v188
    %226 = vmatprep.subr.mxu0 0.0
    %227 = vmatpush1.msra.mxu0 %v187
    %228 = vmatprep.subr.mxu0 0.0
    %229 = vmatpush1.msra.mxu0 %v186
    %230 = vmatprep.subr.mxu0 0.0
    %231 = vmatpush2.msra.mxu0 0.0
    %232 = vmatprep.subr.mxu0 0.0
    %233 = vmatpush2.msra.mxu0 0.0
    %234 = vmatprep.subr.mxu0 0.0
    %235 = vmatpush2.msra.mxu0 0.0
    %236 = vmatprep.subr.mxu0 0.0
    %237 = vmatpush2.msra.mxu0 0.0
    %238 = vmatprep.subr.mxu0 0.0
    %239 = vmatpush2.msra.mxu0 0.0
    %240 = vmatprep.subr.mxu0 0.0
    %241 = vmatpush2.msra.mxu0 0.0
    %242 = vmatprep.subr.mxu0 0.0
    %243 = vmatpush2.msra.mxu0 0.0
    %244 = vmatprep.subr.mxu0 0.0
    %245 = vmatpush2.msra.mxu0 0.0
    %246 = vmatprep.subr.mxu0 0.0
    %247 = vmatpush2.msra.mxu0 0.0
    %248 = vmatprep.subr.mxu0 0.0
    %249 = vmatpush2.msra.mxu0 0.0
    %250 = vmatprep.subr.mxu0 0.0
    %251 = vmatpush2.msra.mxu0 0.0
    %252 = vmatprep.subr.mxu0 0.0
    %253 = vmatpush2.msra.mxu0 0.0
    %254 = vmatprep.subr.mxu0 0.0
    %255 = vmatpush2.msra.mxu0 0.0
    %256 = vmatprep.subr.mxu0 0.0
    %257 = vmatpush2.msra.mxu0 0.0
    %258 = vmatprep.subr.mxu0 0.0
    %259 = vmatpush2.msra.mxu0 0.0
    %260 = vmatprep.subr.mxu0 0.0
    %261 = vmatpush2.msra.mxu0 0.0
    %262 = vmatprep.mubr.f32.mxu0 0.0
    %263 = vmatmul.mubr.f32.gmra.mxu0 %v196
    %v264 = vpop.f32.mrf.mxu0
    %v265 = vadd.f32 0.0, %v264
    %v266 = vpop.f32.mrf.mxu0
    %267 = vdwg.mxu0
    %v268 = vadd.f32 %v185, %v265
    %269 = vst.msk [vmem:[#allocation2] sm:$0xff] %vm29, %v268
    // Predicated region
    $region22: #{tpu_custom_call.1} parent=1 // pred_check
      %p270 = pneg %p18
    $region23: #{tpu_custom_call.1} parent=1 // pred_check_branch
      %272 = sbr.rel (%p270) target = $region25
    $region24: #{tpu_custom_call.1} parent=1 // pred_region
      %v273 = vld [vmem:[#allocation2] sm:$0xff]
      %274 = vst.msk [vmem:[#allocation3] sm:$0xff] %vm29, %v273
    $region25: #{tpu_custom_call.1} parent=1 // pred_fallthru
      _
    // Predicated region
    $region26: #{tpu_custom_call.1} parent=1 // pred_check
      _
    $region27: #{tpu_custom_call.1} parent=1 // pred_check_branch
      %276 = sbr.rel (0) target = $region29
    $region28: #{tpu_custom_call.1} parent=1 // pred_region
      %s278 = ssub.s32 128, 128
      %279 = vsyncadd [#allocation4], %s278
      %s281 = sshll.u32 [#allocation3], 4
      %s282 = int_to_ptr.vmem [resolvable:$true] %s281
      %284 = dma.vmem_to_hbm [thread:$0]  %s282, 128, %s4, [#allocation4]
    $region29: #{tpu_custom_call.1} parent=1 // pred_fallthru
      _
    // Predicated region
    $region30: #{tpu_custom_call.1} parent=1 // pred_check
      _
    $region31: #{tpu_custom_call.1} parent=1 // pred_check_branch
      %286 = sbr.rel (0) target = $region33
    $region32: #{tpu_custom_call.1} parent=1 // pred_region
      %287 = dma.done [#allocation4], 128
    $region33: #{tpu_custom_call.1} parent=1 // pred_fallthru
      _
    %288 = vsyncpa [#allocation4], 1

</llo_original>
